<compile_context>
chip_gen: v6e
topology: v6e:2x2x1
jax: 0.10.0
libtpu: 0.0.40
codegen_flags: <defaults>
</compile_context>

<pallas_src>
import jax
import jax.numpy as jnp
from jax.experimental import pallas as pl
from jax.experimental.pallas import tpu as pltpu


def _sublane_pack(dtype) -> int:
    """Minimum sublane multiple for a dtype's tile layout."""
    itemsize = jnp.dtype(dtype).itemsize
    if itemsize >= 4:
        return 8
    if itemsize == 2:
        return 16
    return 32


def _round_up(x: int, m: int) -> int:
    return -(-x // m) * m


def _vmem_capacity_bytes() -> int:
    """Best-effort per-core VMEM capacity; conservative 64 MiB (v7x) fallback."""
    try:
        cap = int(getattr(pltpu.get_tpu_info(), "vmem_capacity_bytes", 0))
        if cap > 0:
            return cap
    except Exception:
        pass
    return 64 * 1024 * 1024


def _make_bce_kernel(rows: int, lanes: int, row_tile: int, needs_mask: bool):
    groups = row_tile // 8

    def fold(e):
        # (row_tile, lanes) -> (8, lanes) with pure VPU vreg-adds (no XLU,
        # no serialized scalar accumulator).
        return e.reshape(groups, 8, lanes).sum(axis=0)

    def kernel(pred_ref, tgt_ref, out_ref):
        x = pred_ref[...].astype(jnp.float32)
        y = tgt_ref[...].astype(jnp.float32)
        # Numerically-stable BCE with logits (PyTorch's formulation):
        #   max(x, 0) - x*y + log1p(exp(-|x|))
        # TODO(synk): on v7x with bf16 inputs the single EUP slot (exp + log)
        # can bind before HBM; if a trace shows that, run the transcendental
        # path in bf16 while keeping the accumulation in f32.
        elem = jnp.maximum(x, 0.0) - x * y + jnp.log1p(jnp.exp(-jnp.abs(x)))

        if needs_mask:
            i = pl.program_id(0)
            is_last = i == pl.num_programs(0) - 1

            @pl.when(jnp.logical_not(is_last))
            def _():
                out_ref[...] = fold(elem)

            @pl.when(is_last)
            def _():
                # Narrow (row_tile, 1) iota; mask BEFORE the fold because the
                # padded region of the partial tile may hold NaN/Inf garbage.
                row = (
                    jax.lax.broadcasted_iota(jnp.int32, (row_tile, 1), 0)
                    + i * row_tile
                )
                out_ref[...] = fold(jnp.where(row < rows, elem, 0.0))
        else:
            out_ref[...] = fold(elem)

    return kernel


def logit_binary_cross_entropy(pred_score, target_score, weights=None, *, row_tile=None):
    """Pallas implementation of LogitBinaryCrossEntropy.forward.

    pred_score, target_score: (N, C) arrays (logits and soft targets), f32 or
    bf16.  `weights` is accepted for API parity with the PyTorch module and
    ignored (the reference module ignores it too).  Returns a scalar f32 loss.
    """
    del weights  # unused, as in the reference module
    n, c = pred_score.shape
    assert target_score.shape == (n, c)
    total = n * c

    # ---- Lane-dense layout selection ------------------------------------
    # If C is not a multiple of 128 but N*C is, flatten to a 128-lane slab so
    # loads and the (8, lanes) partial-sum stores are unmasked full-lane ops.
    if (c % 128 != 0) and (total % 128 == 0):
        lanes = 128
        rows = total // lanes
        pred2 = pred_score.reshape(rows, lanes)
        tgt2 = target_score.reshape(rows, lanes)
    else:
        lanes = c
        rows = n
        pred2 = pred_score
        tgt2 = target_score
        # TODO(synk): when neither C nor N*C is a multiple of 128, lane stores
        # stay masked; a padded relayout would cost extra HBM traffic.

    in_itemsize = (
        jnp.dtype(pred2.dtype).itemsize + jnp.dtype(tgt2.dtype).itemsize
    )
    in_bytes_per_row = lanes * in_itemsize
    pack = max(_sublane_pack(pred2.dtype), _sublane_pack(tgt2.dtype), 8)

    # ---- Generation-aware tile / VMEM sizing -----------------------------
    vmem_cap = _vmem_capacity_bytes()
    if vmem_cap <= 64 * 1024 * 1024:     # v7x-class: 64 MiB per TensorCore
        target_bytes = 8 << 20           # per-input tile
        vmem_budget = 48 << 20           # ~75% of physical, headroom for Mosaic
    else:                                # v5e / v6e: 128 MiB VMEM
        target_bytes = 12 << 20
        vmem_budget = 100 << 20

    # Per-row VMEM cost: 2 pipeline buffers per input + ~3 f32 in-kernel
    # intermediates (x, y, elem) that the budget must account for.
    per_row_vmem = 2 * in_bytes_per_row + 3 * lanes * 4
    fixed_vmem = 2 * 8 * lanes * 4 + (2 << 20)  # output double-buffer + slack

    if row_tile is None:
        # Dtype-aware: derive rows from the actual bytes per row (bf16 gets
        # ~2x the rows of f32 for the same DMA size per step).
        row_tile = max(
            pack, (2 * target_bytes // max(1, in_bytes_per_row)) // pack * pack
        )
        # Shrink until the whole working set fits this generation's budget.
        max_rows = max(
            pack,
            (vmem_budget - fixed_vmem) // max(1, per_row_vmem) // pack * pack,
        )
        row_tile = min(row_tile, max_rows)
    row_tile = _round_up(int(row_tile), pack)
    row_tile = min(row_tile, _round_up(rows, pack))

    num_tiles = pl.cdiv(rows, row_tile)
    needs_mask = (rows % row_tile) != 0

    vmem_needed = row_tile * per_row_vmem + fixed_vmem
    vmem_limit = int(min(max(vmem_needed, 32 * 1024 * 1024), vmem_budget))

    kernel = _make_bce_kernel(rows, lanes, row_tile, needs_mask)

    partials = pl.pallas_call(
        kernel,
        out_shape=jax.ShapeDtypeStruct((num_tiles * 8, lanes), jnp.float32),
        grid=(num_tiles,),
        in_specs=[
            pl.BlockSpec((row_tile, lanes), lambda i: (i, 0)),
            pl.BlockSpec((row_tile, lanes), lambda i: (i, 0)),
        ],
        out_specs=pl.BlockSpec((8, lanes), lambda i: (i, 0)),
        compiler_params=pltpu.CompilerParams(
            # Independent tiles.  TODO(synk): verify on v7x that both
            # TensorCores are used; if not, switch to pltpu.CORE_PARALLEL.
            dimension_semantics=("parallel",),
            vmem_limit_bytes=vmem_limit,
        ),
    )(pred2, tgt2)

    # Single tiny cross-lane reduce in the wrapper.  mean(elem)*C == sum/N,
    # which also avoids f32 rounding of N*C for very large inputs.
    return jnp.sum(partials, dtype=jnp.float32) / jnp.float32(n)


def _reference(pred, tgt):
    x = pred.astype(jnp.float32)
    y = tgt.astype(jnp.float32)
    elem = jnp.maximum(x, 0.0) - x * y + jnp.log1p(jnp.exp(-jnp.abs(x)))
    return jnp.mean(elem) * pred.shape[1]


if __name__ == "__main__":
    key = jax.random.PRNGKey(0)
    k1, k2, k3, k4 = jax.random.split(key, 4)

    # Case 1: C multiple of 128, ragged N (masked last tile, direct layout).
    N, C = 20, 256
    pred = jax.random.normal(k1, (N, C), dtype=jnp.float32) * 2.0
    target = jax.random.uniform(k2, (N, C), dtype=jnp.float32)  # soft targets
    loss = jax.block_until_ready(logit_binary_cross_entropy(pred, target))
    ref = jax.block_until_ready(_reference(pred, target))
    assert jnp.allclose(loss, ref, rtol=1e-5, atol=1e-5), (loss, ref)

    # Case 2: multi-tile parallel grid + masked last tile.
    loss2 = jax.block_until_ready(
        logit_binary_cross_entropy(pred, target, row_tile=8)
    )
    assert jnp.allclose(loss2, ref, rtol=1e-5, atol=1e-5), (loss2, ref)

    # Case 3: C not a multiple of 128 but N*C is -> lane-dense flattened path.
    N3, C3 = 16, 96
    pred3 = jax.random.normal(k3, (N3, C3), dtype=jnp.float32)
    target3 = jax.random.uniform(k4, (N3, C3), dtype=jnp.float32)
    loss3 = jax.block_until_ready(logit_binary_cross_entropy(pred3, target3))
    ref3 = jax.block_until_ready(_reference(pred3, target3))
    assert jnp.allclose(loss3, ref3, rtol=1e-5, atol=1e-5), (loss3, ref3)

    # Case 4: bf16 inputs (halved HBM traffic; f32 accumulation in-kernel).
    loss4 = jax.block_until_ready(
        logit_binary_cross_entropy(
            pred.astype(jnp.bfloat16), target.astype(jnp.bfloat16)
        )
    )
    ref4 = jax.block_until_ready(
        _reference(pred.astype(jnp.bfloat16), target.astype(jnp.bfloat16))
    )
    assert jnp.allclose(loss4, ref4, rtol=2e-2, atol=2e-2), (loss4, ref4)

    # Case 5: tiny C (< 128), N*C not a multiple of 128 -> fallback masked path.
    N5, C5 = 10, 4
    pred5 = jax.random.normal(k1, (N5, C5), dtype=jnp.float32)
    target5 = jax.random.uniform(k2, (N5, C5), dtype=jnp.float32)
    loss5 = jax.block_until_ready(logit_binary_cross_entropy(pred5, target5))
    ref5 = jax.block_until_ready(_reference(pred5, target5))
    assert jnp.allclose(loss5, ref5, rtol=1e-5, atol=1e-5), (loss5, ref5)

    print("KERNEL_OK")
</pallas_src>

<mosaic_0001>
module attributes {stable_mosaic.version = 11 : i64} {
  func.func @kernel(%arg0: i32, %arg1: memref<24x256xf32, #tpu.memory_space<vmem>>, %arg2: memref<24x256xf32, #tpu.memory_space<vmem>>, %arg3: memref<8x256xf32, #tpu.memory_space<vmem>>) attributes {dimension_semantics = [#tpu.dimension_semantics<parallel>], iteration_bounds = array<i64: 1>, scalar_prefetch = 0 : i64, scratch_operands = 0 : i64, tpu.core_type = #tpu.core_type<tc>, window_params = [{transform_indices = @transform_0, window_bounds = array<i64: 24, 256>}, {transform_indices = @transform_1, window_bounds = array<i64: 24, 256>}, {transform_indices = @transform_2, window_bounds = array<i64: 8, 256>}]} {
    %c0 = arith.constant 0 : index
    %c0_0 = arith.constant 0 : index
    %0 = vector.load %arg1[%c0, %c0_0] : memref<24x256xf32, #tpu.memory_space<vmem>>, vector<24x256xf32>
    %c0_1 = arith.constant 0 : index
    %c0_2 = arith.constant 0 : index
    %1 = vector.load %arg2[%c0_1, %c0_2] : memref<24x256xf32, #tpu.memory_space<vmem>>, vector<24x256xf32>
    %cst = arith.constant 0.000000e+00 : f32
    %2 = vector.broadcast %cst : f32 to vector<24x256xf32>
    %3 = arith.maximumf %0, %2 : vector<24x256xf32>
    %4 = arith.mulf %0, %1 : vector<24x256xf32>
    %5 = arith.subf %3, %4 : vector<24x256xf32>
    %6 = math.absf %0 : vector<24x256xf32>
    %cst_3 = arith.constant 0.000000e+00 : f32
    %7 = vector.broadcast %cst_3 : f32 to vector<24x256xf32>
    %8 = arith.subf %7, %6 : vector<24x256xf32>
    %9 = math.exp %8 : vector<24x256xf32>
    %10 = math.log1p %9 : vector<24x256xf32>
    %11 = arith.addf %5, %10 : vector<24x256xf32>
    %c0_i32 = arith.constant 0 : i32
    %12 = arith.cmpi eq, %arg0, %c0_i32 : i32
    %true = arith.constant true
    %13 = arith.xori %12, %true : i1
    %14 = arith.extui %13 : i1 to i32
    %c0_i32_4 = arith.constant 0 : i32
    %15 = arith.cmpi ne, %14, %c0_i32_4 : i32
    scf.if %15 {
      %18 = vector.shape_cast %11 : vector<24x256xf32> to vector<3x8x256xf32>
      %cst_6 = arith.constant dense<0.000000e+00> : vector<8x256xf32>
      %19 = vector.multi_reduction <add>, %18, %cst_6 [0] : vector<3x8x256xf32> to vector<8x256xf32>
      %c0_7 = arith.constant 0 : index
      %c0_8 = arith.constant 0 : index
      %20 = vector.load %arg3[%c0_7, %c0_8] : memref<8x256xf32, #tpu.memory_space<vmem>>, vector<8x256xf32>
      tpu.vector_store %arg3[%c0_7, %c0_8], %19 {strides = array<i32>} : memref<8x256xf32, #tpu.memory_space<vmem>>, vector<8x256xf32>,
    } else {
    }
    %16 = arith.extui %12 : i1 to i32
    %c0_i32_5 = arith.constant 0 : i32
    %17 = arith.cmpi ne, %16, %c0_i32_5 : i32
    scf.if %17 {
      %18 = tpu.iota {dimensions = array<i32: 0>} : vector<24x1xi32>
      %c24_i32 = arith.constant 24 : i32
      %19 = arith.muli %arg0, %c24_i32 : i32
      %20 = vector.broadcast %19 : i32 to vector<24x1xi32>
      %21 = arith.addi %18, %20 : vector<24x1xi32>
      %c20_i32 = arith.constant 20 : i32
      %22 = vector.broadcast %c20_i32 : i32 to vector<24x1xi32>
      %23 = arith.cmpi slt, %21, %22 : vector<24x1xi32>
      %cst_6 = arith.constant 0.000000e+00 : f32
      %24 = vector.shape_cast %23 : vector<24x1xi1> to vector<24x1xi1>
      %25 = vector.broadcast %24 : vector<24x1xi1> to vector<24x256xi1>
      %26 = vector.broadcast %cst_6 : f32 to vector<24x256xf32>
      %27 = arith.select %25, %11, %26 : vector<24x256xi1>, vector<24x256xf32>
      %28 = vector.shape_cast %27 : vector<24x256xf32> to vector<3x8x256xf32>
      %cst_7 = arith.constant dense<0.000000e+00> : vector<8x256xf32>
      %29 = vector.multi_reduction <add>, %28, %cst_7 [0] : vector<3x8x256xf32> to vector<8x256xf32>
      %c0_8 = arith.constant 0 : index
      %c0_9 = arith.constant 0 : index
      %30 = vector.load %arg3[%c0_8, %c0_9] : memref<8x256xf32, #tpu.memory_space<vmem>>, vector<8x256xf32>
      tpu.vector_store %arg3[%c0_8, %c0_9], %29 {strides = array<i32>} : memref<8x256xf32, #tpu.memory_space<vmem>>, vector<8x256xf32>,
    } else {
    }
    return
  }
  func.func @transform_0(%arg0: i32) -> (i32, i32) {
    %c0_i32 = arith.constant 0 : i32
    %c0_i32_0 = arith.constant 0 : i32
    return %arg0, %c0_i32 : i32, i32
  }
  func.func @transform_1(%arg0: i32) -> (i32, i32) {
    %c0_i32 = arith.constant 0 : i32
    %c0_i32_0 = arith.constant 0 : i32
    return %arg0, %c0_i32 : i32, i32
  }
  func.func @transform_2(%arg0: i32) -> (i32, i32) {
    %c0_i32 = arith.constant 0 : i32
    %c0_i32_0 = arith.constant 0 : i32
    return %arg0, %c0_i32 : i32, i32
  }
}

</mosaic_0001>

<llo_original>
// kernel: tpu_custom_call.1
$region0: #{tpu_custom_call.1}
  #allocation0 [shape = 'u32[]', space=smem, size = 0x4, offset = 0x4, fixed_abs, tag = 'smem constant byte address 0x4 - core index']
  #allocation1 [shape = 'u32[144,128]{1,0:T(1,128)}', space=vmem, size = 0x12000, scoped, tag = 'internal scratch']
  %s0 = inlined_call_operand.hbm [shape: f32[20,256], index: 0, kind: input, shape index: {}]
  %s1 = inlined_call_operand.hbm [shape: f32[20,256], index: 1, kind: input, shape index: {}]
  %s2 = inlined_call_operand.hbm [shape: f32[8,256], index: 2, kind: output, shape index: {}]
  %s3 = sld [smem:[#allocation0]]
  $region34: #{tpu_custom_call.1} parent=0
    _
  %s5 = ssub.s32 1, %s3
  %s6 = scalar_select 0, %s5, %s3
  $region1: #{tpu_custom_call.1} parent=0
    #allocation2 [shape = 'u8[24576]{0}', space=vmem, size = 0x6000, scoped, tag = 'input window, operand 0, single buffered']
    #allocation3 [shape = 's32[1]{0}', space=sflag, size = 0x4, scoped, tag = 'scoped memory for tpu_custom_call.1']
    #allocation4 [shape = 's32[1]{0}', space=sflag, size = 0x4, scoped, tag = 'scoped memory for tpu_custom_call.1']
    #allocation5 [shape = 'u8[24576]{0}', space=vmem, size = 0x6000, scoped, tag = 'input window, operand 1, single buffered']
    #allocation6 [shape = 's32[1]{0}', space=sflag, size = 0x4, scoped, tag = 'scoped memory for tpu_custom_call.1']
    #allocation7 [shape = 'u8[8192]{0}', space=vmem, size = 0x2000, scoped, tag = 'output window, operand 0, single buffered']
    %7 = vsyncpa [#allocation3], 0
    %8 = vsyncpa [#allocation6], 0
    %9 = vsyncpa [#allocation4], 0
    // Predicated region
    $region2: #{tpu_custom_call.1} parent=1 // pred_check
      _
    $region3: #{tpu_custom_call.1} parent=1 // pred_check_branch
      %11 = sbr.rel (0) target = $region5
    $region4: #{tpu_custom_call.1} parent=1 // pred_region
      %s13 = ssub.s32 768, 768
      %14 = vsyncadd [#allocation3], %s13
      %s15 = sshll.u32 [#allocation2], 4
      %s16 = int_to_ptr.vmem [resolvable:$true] %s15
      %21 = dma.hbm_to_vmem [thread:$0]  %s0, 768, %s16, [#allocation3], 256, 256, 16
    $region5: #{tpu_custom_call.1} parent=1 // pred_fallthru
      _
    // Predicated region
    $region6: #{tpu_custom_call.1} parent=1 // pred_check
      _
    $region7: #{tpu_custom_call.1} parent=1 // pred_check_branch
      %23 = sbr.rel (0) target = $region9
    $region8: #{tpu_custom_call.1} parent=1 // pred_region
      %s25 = ssub.s32 768, 768
      %26 = vsyncadd [#allocation6], %s25
      %s27 = sshll.u32 [#allocation5], 4
      %s28 = int_to_ptr.vmem [resolvable:$true] %s27
      %33 = dma.hbm_to_vmem [thread:$0]  %s1, 768, %s28, [#allocation6], 256, 256, 16
    $region9: #{tpu_custom_call.1} parent=1 // pred_fallthru
      _
    // Predicated region
    $region10: #{tpu_custom_call.1} parent=1 // pred_check
      _
    $region11: #{tpu_custom_call.1} parent=1 // pred_check_branch
      %35 = sbr.rel (0) target = $region13
    $region12: #{tpu_custom_call.1} parent=1 // pred_region
      %36 = dma.done [#allocation3], 768
    $region13: #{tpu_custom_call.1} parent=1 // pred_fallthru
      _
    // Predicated region
    $region14: #{tpu_custom_call.1} parent=1 // pred_check
      _
    $region15: #{tpu_custom_call.1} parent=1 // pred_check_branch
      %38 = sbr.rel (0) target = $region17
    $region16: #{tpu_custom_call.1} parent=1 // pred_region
      %39 = dma.done [#allocation6], 768
    $region17: #{tpu_custom_call.1} parent=1 // pred_fallthru
      _
    %v40 = vld [vmem:[#allocation2] sm:$0xff]
    %v41 = vld [vmem:[#allocation2 + $0x8] sm:$0xff]
    %v42 = vld [vmem:[#allocation2 + $0x10] sm:$0xff]
    %v43 = vld [vmem:[#allocation2 + $0x18] sm:$0xff]
    %v44 = vld [vmem:[#allocation2 + $0x20] sm:$0xff]
    %v45 = vld [vmem:[#allocation2 + $0x28] sm:$0xff]
    %v46 = vld [vmem:[#allocation5] sm:$0xff]
    %v47 = vld [vmem:[#allocation5 + $0x8] sm:$0xff]
    %v48 = vld [vmem:[#allocation5 + $0x10] sm:$0xff]
    %v49 = vld [vmem:[#allocation5 + $0x18] sm:$0xff]
    %v50 = vld [vmem:[#allocation5 + $0x20] sm:$0xff]
    %v51 = vld [vmem:[#allocation5 + $0x28] sm:$0xff]
    %v52 = vmax.f32 %v40, 0.0
    %v53 = vmax.f32 %v41, 0.0
    %v54 = vmax.f32 %v42, 0.0
    %v55 = vmax.f32 %v43, 0.0
    %v56 = vmax.f32 %v44, 0.0
    %v57 = vmax.f32 %v45, 0.0
    %v58 = vmul.f32 %v40, %v46
    %v59 = vmul.f32 %v41, %v47
    %v60 = vmul.f32 %v42, %v48
    %v61 = vmul.f32 %v43, %v49
    %v62 = vmul.f32 %v44, %v50
    %v63 = vmul.f32 %v45, %v51
    %v64 = vsub.f32 %v52, %v58
    %v65 = vsub.f32 %v53, %v59
    %v66 = vsub.f32 %v54, %v60
    %v67 = vsub.f32 %v55, %v61
    %v68 = vsub.f32 %v56, %v62
    %v69 = vsub.f32 %v57, %v63
    %v70 = vand.u32 2147483647, %v40
    %v71 = vand.u32 2147483647, %v41
    %v72 = vand.u32 2147483647, %v42
    %v73 = vand.u32 2147483647, %v43
    %v74 = vand.u32 2147483647, %v44
    %v75 = vand.u32 2147483647, %v45
    %v76 = vsub.f32 0.0, %v70
    %v77 = vsub.f32 0.0, %v71
    %v78 = vsub.f32 0.0, %v72
    %v79 = vsub.f32 0.0, %v73
    %v80 = vsub.f32 0.0, %v74
    %v81 = vsub.f32 0.0, %v75
    %v82 = vmul.f32 %v76, 1.442695
    %v83 = vpow.pop %v82
    %v84 = vmul.f32 %v77, 1.442695
    %v85 = vpow.pop %v84
    %v86 = vmul.f32 %v78, 1.442695
    %v87 = vpow.pop %v86
    %v88 = vmul.f32 %v79, 1.442695
    %v89 = vpow.pop %v88
    %v90 = vmul.f32 %v80, 1.442695
    %v91 = vpow.pop %v90
    %v92 = vmul.f32 %v81, 1.442695
    %v93 = vpow.pop %v92
    %v94 = vadd.f32 %v83, 1.0
    %v95 = vlog2.pop %v94
    %v96 = vmul.f32 %v95, 0.6931472
    %v97 = vmul.f32 -0.5, %v83
    %v98 = vadd.f32 %v97, 1.0
    %v99 = vmul.f32 %v98, %v83
    %v100 = vand.u32 2147483647, %v83
    %vm101 = vcmp.lt.f32.partialorder %v100, 0.0004427343
    %v102 = vsel %vm101, %v99, %v96
    %v103 = vadd.f32 %v85, 1.0
    %v104 = vlog2.pop %v103
    %v105 = vmul.f32 %v104, 0.6931472
    %v106 = vmul.f32 -0.5, %v85
    %v107 = vadd.f32 %v106, 1.0
    %v108 = vmul.f32 %v107, %v85
    %v109 = vand.u32 2147483647, %v85
    %vm110 = vcmp.lt.f32.partialorder %v109, 0.0004427343
    %v111 = vsel %vm110, %v108, %v105
    %v112 = vadd.f32 %v87, 1.0
    %v113 = vlog2.pop %v112
    %v114 = vmul.f32 %v113, 0.6931472
    %v115 = vmul.f32 -0.5, %v87
    %v116 = vadd.f32 %v115, 1.0
    %v117 = vmul.f32 %v116, %v87
    %v118 = vand.u32 2147483647, %v87
    %vm119 = vcmp.lt.f32.partialorder %v118, 0.0004427343
    %v120 = vsel %vm119, %v117, %v114
    %v121 = vadd.f32 %v89, 1.0
    %v122 = vlog2.pop %v121
    %v123 = vmul.f32 %v122, 0.6931472
    %v124 = vmul.f32 -0.5, %v89
    %v125 = vadd.f32 %v124, 1.0
    %v126 = vmul.f32 %v125, %v89
    %v127 = vand.u32 2147483647, %v89
    %vm128 = vcmp.lt.f32.partialorder %v127, 0.0004427343
    %v129 = vsel %vm128, %v126, %v123
    %v130 = vadd.f32 %v91, 1.0
    %v131 = vlog2.pop %v130
    %v132 = vmul.f32 %v131, 0.6931472
    %v133 = vmul.f32 -0.5, %v91
    %v134 = vadd.f32 %v133, 1.0
    %v135 = vmul.f32 %v134, %v91
    %v136 = vand.u32 2147483647, %v91
    %vm137 = vcmp.lt.f32.partialorder %v136, 0.0004427343
    %v138 = vsel %vm137, %v135, %v132
    %v139 = vadd.f32 %v93, 1.0
    %v140 = vlog2.pop %v139
    %v141 = vmul.f32 %v140, 0.6931472
    %v142 = vmul.f32 -0.5, %v93
    %v143 = vadd.f32 %v142, 1.0
    %v144 = vmul.f32 %v143, %v93
    %v145 = vand.u32 2147483647, %v93
    %vm146 = vcmp.lt.f32.partialorder %v145, 0.0004427343
    %v147 = vsel %vm146, %v144, %v141
    %v148 = vadd.f32 %v64, %v102
    %v149 = vadd.f32 %v65, %v111
    %v150 = vadd.f32 %v66, %v120
    %v151 = vadd.f32 %v67, %v129
    %v152 = vadd.f32 %v68, %v138
    %v153 = vadd.f32 %v69, %v147
    %p154 = scmp.eq.s32.totalorder 0, 0
    %p155 = scmp.ne.s32.totalorder 0, 0
    // Predicated region
    $region18: #{tpu_custom_call.1} parent=1 // pred_check
      %p156 = pneg %p155
    $region19: #{tpu_custom_call.1} parent=1 // pred_check_branch
      %158 = sbr.rel (%p156) target = $region21
    $region20: #{tpu_custom_call.1} parent=1 // pred_region
      %v159 = vadd.f32 %v148, %v150
      %v160 = vadd.f32 %v159, %v152
      %v161 = vadd.f32 %v149, %v151
      %v162 = vadd.f32 %v161, %v153
      %163 = vst [vmem:[#allocation7] sm:$0xff] %v160
      %164 = vst [vmem:[#allocation7 + $0x8] sm:$0xff] %v162
    $region21: #{tpu_custom_call.1} parent=1 // pred_fallthru
      _
    // Predicated region
    $region22: #{tpu_custom_call.1} parent=1 // pred_check
      %p165 = pneg %p154
    $region23: #{tpu_custom_call.1} parent=1 // pred_check_branch
      %167 = sbr.rel (%p165) target = $region25
    $region24: #{tpu_custom_call.1} parent=1 // pred_region
      %v168 = vlaneseq
      %v169 = vshrl.u32 %v168, 7
      %v170 = vadd.s32 %v169, 8
      %v171 = vadd.s32 %v169, 16
      %s172 = smul.u32 0, 24
      %v173 = vstv %s172
      %v174 = vadd.s32 %v169, %v173
      %v175 = vadd.s32 %v170, %v173
      %v176 = vadd.s32 %v171, %v173
      %vm177 = vcmp.lt.s32.totalorder %v174, 20
      %vm178 = vcmp.lt.s32.totalorder %v175, 20
      %vm179 = vcmp.lt.s32.totalorder %v176, 20
      %v180 = vsel %vm177, 1, 0
      %v181 = vsel %vm178, 1, 0
      %v182 = vsel %vm179, 1, 0
      %vm183 = vcmp.eq.s32.totalorder %v180, 1
      %vm184 = vcmp.eq.s32.totalorder %v181, 1
      %vm185 = vcmp.eq.s32.totalorder %v182, 1
      %v186 = vsel %vm183, %v148, 0.0
      %v187 = vsel %vm183, %v149, 0.0
      %v188 = vsel %vm184, %v150, 0.0
      %v189 = vsel %vm184, %v151, 0.0
      %v190 = vsel %vm185, %v152, 0.0
      %v191 = vsel %vm185, %v153, 0.0
      %v192 = vadd.f32 %v186, %v188
      %v193 = vadd.f32 %v192, %v190
      %v194 = vadd.f32 %v187, %v189
      %v195 = vadd.f32 %v194, %v191
      %196 = vst [vmem:[#allocation7] sm:$0xff] %v193
      %197 = vst [vmem:[#allocation7 + $0x8] sm:$0xff] %v195
    $region25: #{tpu_custom_call.1} parent=1 // pred_fallthru
      _
    // Predicated region
    $region26: #{tpu_custom_call.1} parent=1 // pred_check
      _
    $region27: #{tpu_custom_call.1} parent=1 // pred_check_branch
      %199 = sbr.rel (0) target = $region29
    $region28: #{tpu_custom_call.1} parent=1 // pred_region
      %s201 = ssub.s32 256, 256
      %202 = vsyncadd [#allocation4], %s201
      %s204 = sshll.u32 [#allocation7], 4
      %s205 = int_to_ptr.vmem [resolvable:$true] %s204
      %207 = dma.vmem_to_hbm [thread:$0]  %s205, 256, %s2, [#allocation4]
    $region29: #{tpu_custom_call.1} parent=1 // pred_fallthru
      _
    // Predicated region
    $region30: #{tpu_custom_call.1} parent=1 // pred_check
      _
    $region31: #{tpu_custom_call.1} parent=1 // pred_check_branch
      %209 = sbr.rel (0) target = $region33
    $region32: #{tpu_custom_call.1} parent=1 // pred_region
      %210 = dma.done [#allocation4], 256
    $region33: #{tpu_custom_call.1} parent=1 // pred_fallthru
      _
    %211 = vsyncpa [#allocation3], 1
    %212 = vsyncpa [#allocation6], 1
    %213 = vsyncpa [#allocation4], 1

</llo_original>
